<compile_context>
chip_gen: v6e
topology: v6e:2x2x1
jax: 0.10.0
libtpu: 0.0.40
codegen_flags: <defaults>
</compile_context>

<pallas_src>
import functools

import jax
import jax.numpy as jnp
from jax import lax
from jax.experimental import pallas as pl
from jax.experimental.pallas import tpu as pltpu


def _spatial_gather_kernel(probs_ref, feats_ref, out_ref,
                           m_ref, l_ref, acc_ref,
                           *, scale, hw, hw_block, needs_mask, probs_resident):
    # probs_ref: (1, K, THW) or resident (1, K, HW)
    # feats_ref: (1, Ct, THW)   out_ref: (1, K, Ct)
    # scratch:   m_ref/l_ref: (K, 1) f32, acc_ref: (K, Ct) f32
    hw_i = pl.program_id(2)
    last = pl.num_programs(2) - 1

    @pl.when(hw_i == 0)
    def _init():
        m_ref[...] = jnp.full_like(m_ref, -jnp.inf)
        l_ref[...] = jnp.zeros_like(l_ref)
        acc_ref[...] = jnp.zeros_like(acc_ref)

    # probs: per-step tile, or a per-batch resident (K, HW) slab sliced here.
    if probs_resident:
        align = 128 if hw_block % 128 == 0 else hw_block
        start = pl.multiple_of(hw_i * hw_block, align)
        probs_blk = probs_ref[0, :, pl.ds(start, hw_block)]       # (K, THW)
    else:
        probs_blk = probs_ref[0]                                  # (K, THW)

    # Softmax math in f32; feats stays in its native dtype for the MXU.
    logits = probs_blk.astype(jnp.float32)
    if scale != 1.0:
        logits = scale * logits
    feats = feats_ref[0]                                          # (Ct, THW)

    if needs_mask:
        lane = lax.broadcasted_iota(jnp.int32, (1, hw_block), 1)
        valid = (hw_i * hw_block + lane) < hw                     # (1, THW)
        logits = jnp.where(valid, logits, -jnp.inf)

    m_prev = m_ref[...]                                           # (K, 1)
    m_new = jnp.maximum(m_prev, jnp.max(logits, axis=-1, keepdims=True))
    alpha = jnp.exp(m_prev - m_new)                               # rescale old partials
    p = jnp.exp(logits - m_new)                                   # (K, THW), unnormalized
    if needs_mask:
        p = jnp.where(valid, p, 0.0)

    l_ref[...] = alpha * l_ref[...] + jnp.sum(p, axis=-1, keepdims=True)
    m_ref[...] = m_new

    def _accumulate(f):
        # (K, THW) contracted with (Ct, THW) over HW -> (K, Ct); f32 accumulate.
        acc_ref[...] = alpha * acc_ref[...] + lax.dot_general(
            p.astype(f.dtype), f,
            dimension_numbers=(((1,), (1,)), ((), ())),
            preferred_element_type=jnp.float32,
        )

    if needs_mask:
        # Only the FINAL hw step has out-of-bounds lanes: pay for the full-tile feats
        # select (the dominant per-step VPU pass) there only.  The feats mask on the
        # last tile is required — p==0 is not enough if OOB padding is Inf/NaN.
        @pl.when(hw_i == last)
        def _masked_dot():
            _accumulate(jnp.where(valid, feats, jnp.zeros_like(feats)))

        @pl.when(hw_i < last)
        def _fast_dot():
            _accumulate(feats)
    else:
        _accumulate(feats)

    @pl.when(hw_i == last)
    def _finalize():
        # Exact divide: once per (K, Ct) output block, negligible cost, better parity.
        inv_l = pl.reciprocal(l_ref[...], approx=False)           # (K, 1)
        out_ref[0] = (acc_ref[...] * inv_l).astype(out_ref.dtype)


def _vmem_capacity_bytes():
    try:
        return int(pltpu.get_tpu_info().vmem_capacity_bytes)
    except Exception:
        return 64 * 1024 * 1024   # conservative (v7x-sized) fallback


def spatial_gather(feats, probs, scale=1.0, *, hw_block=None, c_block=None):
    """feats: (B, C, H, W), probs: (B, K, H, W) -> (B, C, K, 1) in feats.dtype."""
    B, C, H, W = feats.shape
    Bp, K, Hp, Wp = probs.shape
    assert (Bp, Hp, Wp) == (B, H, W)
    HW = H * W

    feats_r = feats.reshape(B, C, HW)
    probs_r = probs.reshape(B, K, HW)

    fbytes = jnp.dtype(feats_r.dtype).itemsize
    pbytes = jnp.dtype(probs_r.dtype).itemsize
    obytes = fbytes                                  # output emitted in feats.dtype

    vmem_cap = _vmem_capacity_bytes()
    # ~64 MiB/TC => v7x-class (2 TCs, scarce VMEM); ~128 MiB => v5e/v6e (1 TC).
    v7x_like = vmem_cap <= 80 * 1024 * 1024

    # ---- C split: only on 2-TC chips and only when B can't feed both cores ----------
    if c_block is None:
        if v7x_like and (B % 2 == 1) and C > 256 and C % 256 == 0:
            c_block = 256
        else:
            c_block = C
    assert C % c_block == 0, "c_block must divide C"
    assert c_block == C or c_block % 128 == 0, "c_block must be 128-multiple or full C"
    n_c = C // c_block

    # ---- probs residency: when C is split, keep the (K, HW) probs slab resident -----
    # (block index constant across c and hw => DMA'd once per batch element).
    probs_resident = (n_c > 1) and (K * HW * pbytes <= 2 * 1024 * 1024)

    # ---- hw tile: largest lane-dense tile whose double-buffered stream fits budget --
    stream_target = (20 << 20) if v7x_like else (44 << 20)

    def _stream_bytes(hb):
        b = 2 * c_block * hb * fbytes                # feats tiles (double-buffered)
        b += (K * HW * pbytes) if probs_resident else (2 * K * hb * pbytes)
        return b

    if hw_block is None:
        if HW < 128:
            hw_block = HW                            # full (lane dim == full array dim)
        else:
            hw_block = 128
            for cand in (8192, 4096, 2048, 1024, 512, 256):
                if cand <= HW and _stream_bytes(cand) <= stream_target:
                    hw_block = cand
                    break
    assert hw_block == HW or hw_block % 128 == 0, "HW tile must be 128-multiple or full"
    n_hw = pl.cdiv(HW, hw_block)
    needs_mask = (HW % hw_block) != 0
    if needs_mask:
        # A partial last tile would make the in-kernel pl.ds slice run past the
        # resident probs buffer; fall back to per-step probs tiles in that case.
        probs_resident = False

    # ---- VMEM budget hint: actual footprint (no double-counted 2x), device-capped ---
    wanted = (_stream_bytes(hw_block)
              + 2 * K * c_block * obytes             # output block (conservatively 2x)
              + (K * c_block + 2 * K) * 4)           # acc / m / l scratch
    cap_limit = max(32 << 20, vmem_cap - (12 << 20)) # ~52 MiB on v7x, ~116 on v5e/v6e
    vmem_limit = int(min(cap_limit, max(32 << 20, int(1.25 * wanted) + (2 << 20))))

    kernel = functools.partial(
        _spatial_gather_kernel,
        scale=float(scale), hw=HW, hw_block=hw_block,
        needs_mask=needs_mask, probs_resident=probs_resident,
    )

    if probs_resident:
        probs_spec = pl.BlockSpec((1, K, HW), lambda b, c, h: (b, 0, 0))
    else:
        probs_spec = pl.BlockSpec((1, K, hw_block), lambda b, c, h: (b, 0, h))

    out = pl.pallas_call(
        kernel,
        out_shape=jax.ShapeDtypeStruct((B, K, C), feats.dtype),
        grid=(B, n_c, n_hw),
        in_specs=[
            probs_spec,
            pl.BlockSpec((1, c_block, hw_block), lambda b, c, h: (b, c, h)),
        ],
        out_specs=pl.BlockSpec((1, K, c_block), lambda b, c, h: (b, 0, c)),
        scratch_shapes=[
            pltpu.VMEM((K, 1), jnp.float32),         # running max m
            pltpu.VMEM((K, 1), jnp.float32),         # running sum l
            pltpu.VMEM((K, c_block), jnp.float32),   # unnormalized accumulator
        ],
        compiler_params=pltpu.CompilerParams(
            dimension_semantics=("parallel", "parallel", "arbitrary"),
            vmem_limit_bytes=vmem_limit,
        ),
    )(probs_r, feats_r)

    # permute(0, 2, 1).unsqueeze(3) -> (B, C, K, 1); tiny epilogue, left to XLA.
    return jnp.transpose(out, (0, 2, 1))[..., None]


def _reference(feats, probs, scale=1.0):
    B, C, H, W = feats.shape
    _, K, _, _ = probs.shape
    probs_r = probs.reshape(B, K, H * W).astype(jnp.float32)
    feats_r = feats.reshape(B, C, H * W).astype(jnp.float32).transpose(0, 2, 1)
    p = jax.nn.softmax(scale * probs_r, axis=2)                  # (B, K, HW)
    ctx = jnp.einsum("bkh,bhc->bkc", p, feats_r)                 # (B, K, C)
    return jnp.transpose(ctx, (0, 2, 1))[..., None]              # (B, C, K, 1)


def _run_case(idx, B, C, K, H, W, feats_dtype, probs_dtype, scale,
              hw_block, c_block, tol):
    key = jax.random.fold_in(jax.random.PRNGKey(0), idx)
    kf, kp = jax.random.split(key)
    feats = jax.random.normal(kf, (B, C, H, W), dtype=jnp.float32).astype(feats_dtype)
    probs = jax.random.normal(kp, (B, K, H, W), dtype=jnp.float32).astype(probs_dtype)

    out = spatial_gather(feats, probs, scale=scale,
                         hw_block=hw_block, c_block=c_block)
    jax.block_until_ready(out)

    ref = _reference(feats, probs, scale=scale)
    assert out.shape == (B, C, K, 1), out.shape
    err = float(jnp.max(jnp.abs(out.astype(jnp.float32) - ref)))
    assert jnp.allclose(out.astype(jnp.float32), ref, atol=tol, rtol=tol), (idx, err)


if __name__ == "__main__":
    # Case 1: multi-step online-softmax accumulation over HW (HW=256, tile=128).
    _run_case(1, B=2, C=8, K=4, H=16, W=16,
              feats_dtype=jnp.float32, probs_dtype=jnp.float32,
              scale=1.0, hw_block=128, c_block=None, tol=2e-3)

    # Case 2: HW=216 not a multiple of the tile -> gated last-step feats mask path.
    _run_case(2, B=1, C=16, K=5, H=12, W=18,
              feats_dtype=jnp.float32, probs_dtype=jnp.float32,
              scale=0.5, hw_block=128, c_block=None, tol=2e-3)

    # Case 3: forced C-split -> resident-probs path + native-bf16 feats on the MXU,
    #         output emitted directly in bf16.
    _run_case(3, B=1, C=256, K=4, H=16, W=16,
              feats_dtype=jnp.bfloat16, probs_dtype=jnp.float32,
              scale=1.0, hw_block=None, c_block=128, tol=4e-2)

    # Case 4: fully automatic (device-aware) tiling, partial last HW tile.
    _run_case(4, B=2, C=64, K=7, H=24, W=24,
              feats_dtype=jnp.float32, probs_dtype=jnp.float32,
              scale=1.0, hw_block=None, c_block=None, tol=2e-3)

    print("KERNEL_OK")
</pallas_src>

<mosaic_0001>
module attributes {stable_mosaic.version = 11 : i64} {
  func.func @_spatial_gather_kernel(%arg0: i32, %arg1: i32, %arg2: i32, %arg3: memref<1x4x128xf32, #tpu.memory_space<vmem>>, %arg4: memref<1x8x128xf32, #tpu.memory_space<vmem>>, %arg5: memref<1x4x8xf32, #tpu.memory_space<vmem>>, %arg6: memref<4x1xf32, #tpu.memory_space<vmem>>, %arg7: memref<4x1xf32, #tpu.memory_space<vmem>>, %arg8: memref<4x8xf32, #tpu.memory_space<vmem>>) attributes {dimension_semantics = [#tpu.dimension_semantics<parallel>, #tpu.dimension_semantics<parallel>, #tpu.dimension_semantics<arbitrary>], iteration_bounds = array<i64: 2, 1, 2>, scalar_prefetch = 0 : i64, scratch_operands = 3 : i64, tpu.core_type = #tpu.core_type<tc>, window_params = [{transform_indices = @transform_0, window_bounds = array<i64: 1, 4, 128>}, {transform_indices = @transform_1, window_bounds = array<i64: 1, 8, 128>}, {transform_indices = @transform_2, window_bounds = array<i64: 1, 4, 8>}]} {
    %c0_i32 = arith.constant 0 : i32
    %0 = arith.cmpi eq, %arg2, %c0_i32 : i32
    %1 = arith.extui %0 : i1 to i32
    %c0_i32_0 = arith.constant 0 : i32
    %2 = arith.cmpi ne, %1, %c0_i32_0 : i32
    scf.if %2 {
      %cst_21 = arith.constant 0xFF800000 : f32
      %32 = vector.broadcast %cst_21 : f32 to vector<4x1xf32>
      %c0_22 = arith.constant 0 : index
      %c0_23 = arith.constant 0 : index
      %33 = vector.load %arg6[%c0_22, %c0_23] : memref<4x1xf32, #tpu.memory_space<vmem>>, vector<4x1xf32>
      tpu.vector_store %arg6[%c0_22, %c0_23], %32 {strides = array<i32>} : memref<4x1xf32, #tpu.memory_space<vmem>>, vector<4x1xf32>,
      %cst_24 = arith.constant 0.000000e+00 : f32
      %34 = vector.broadcast %cst_24 : f32 to vector<4x1xf32>
      %c0_25 = arith.constant 0 : index
      %c0_26 = arith.constant 0 : index
      %35 = vector.load %arg7[%c0_25, %c0_26] : memref<4x1xf32, #tpu.memory_space<vmem>>, vector<4x1xf32>
      tpu.vector_store %arg7[%c0_25, %c0_26], %34 {strides = array<i32>} : memref<4x1xf32, #tpu.memory_space<vmem>>, vector<4x1xf32>,
      %cst_27 = arith.constant 0.000000e+00 : f32
      %36 = vector.broadcast %cst_27 : f32 to vector<4x8xf32>
      %c0_28 = arith.constant 0 : index
      %c0_29 = arith.constant 0 : index
      %37 = vector.load %arg8[%c0_28, %c0_29] : memref<4x8xf32, #tpu.memory_space<vmem>>, vector<4x8xf32>
      tpu.vector_store %arg8[%c0_28, %c0_29], %36 {strides = array<i32>} : memref<4x8xf32, #tpu.memory_space<vmem>>, vector<4x8xf32>,
    } else {
    }
    %c0 = arith.constant 0 : index
    %c0_1 = arith.constant 0 : index
    %c0_2 = arith.constant 0 : index
    %3 = vector.load %arg3[%c0, %c0_1, %c0_2] : memref<1x4x128xf32, #tpu.memory_space<vmem>>, vector<1x4x128xf32>
    %4 = vector.shape_cast %3 : vector<1x4x128xf32> to vector<4x128xf32>
    %c0_3 = arith.constant 0 : index
    %c0_4 = arith.constant 0 : index
    %c0_5 = arith.constant 0 : index
    %5 = vector.load %arg4[%c0_3, %c0_4, %c0_5] : memref<1x8x128xf32, #tpu.memory_space<vmem>>, vector<1x8x128xf32>
    %6 = vector.shape_cast %5 : vector<1x8x128xf32> to vector<8x128xf32>
    %c0_6 = arith.constant 0 : index
    %c0_7 = arith.constant 0 : index
    %7 = vector.load %arg6[%c0_6, %c0_7] : memref<4x1xf32, #tpu.memory_space<vmem>>, vector<4x1xf32>
    %cst = arith.constant dense<0xFF800000> : vector<4xf32>
    %8 = vector.multi_reduction <maximumf>, %4, %cst [1] : vector<4x128xf32> to vector<4xf32>
    %9 = vector.shape_cast %8 : vector<4xf32> to vector<4x1xf32>
    %10 = arith.maximumf %7, %9 : vector<4x1xf32>
    %11 = arith.subf %7, %10 : vector<4x1xf32>
    %12 = math.exp %11 : vector<4x1xf32>
    %13 = vector.broadcast %10 : vector<4x1xf32> to vector<4x128xf32>
    %14 = arith.subf %4, %13 : vector<4x128xf32>
    %15 = math.exp %14 : vector<4x128xf32>
    %c0_8 = arith.constant 0 : index
    %c0_9 = arith.constant 0 : index
    %16 = vector.load %arg7[%c0_8, %c0_9] : memref<4x1xf32, #tpu.memory_space<vmem>>, vector<4x1xf32>
    %17 = arith.mulf %12, %16 : vector<4x1xf32>
    %cst_10 = arith.constant dense<0.000000e+00> : vector<4xf32>
    %18 = vector.multi_reduction <add>, %15, %cst_10 [1] : vector<4x128xf32> to vector<4xf32>
    %19 = vector.shape_cast %18 : vector<4xf32> to vector<4x1xf32>
    %20 = arith.addf %17, %19 : vector<4x1xf32>
    %c0_11 = arith.constant 0 : index
    %c0_12 = arith.constant 0 : index
    %21 = vector.load %arg7[%c0_11, %c0_12] : memref<4x1xf32, #tpu.memory_space<vmem>>, vector<4x1xf32>
    tpu.vector_store %arg7[%c0_11, %c0_12], %20 {strides = array<i32>} : memref<4x1xf32, #tpu.memory_space<vmem>>, vector<4x1xf32>,
    %c0_13 = arith.constant 0 : index
    %c0_14 = arith.constant 0 : index
    %22 = vector.load %arg6[%c0_13, %c0_14] : memref<4x1xf32, #tpu.memory_space<vmem>>, vector<4x1xf32>
    tpu.vector_store %arg6[%c0_13, %c0_14], %10 {strides = array<i32>} : memref<4x1xf32, #tpu.memory_space<vmem>>, vector<4x1xf32>,
    %c0_15 = arith.constant 0 : index
    %c0_16 = arith.constant 0 : index
    %23 = vector.load %arg8[%c0_15, %c0_16] : memref<4x8xf32, #tpu.memory_space<vmem>>, vector<4x8xf32>
    %24 = vector.broadcast %12 : vector<4x1xf32> to vector<4x8xf32>
    %25 = arith.mulf %24, %23 : vector<4x8xf32>
    %cst_17 = arith.constant dense<0.000000e+00> : vector<4x8xf32>
    %26 = tpu.matmul %15, %6, %cst_17 {dimension_numbers = #tpu.dot_dimension_numbers<[1], [1], [0], [0], [0, 0, 1, 0], [], []>} : vector<4x128xf32>, vector<8x128xf32>, vector<4x8xf32> -> vector<4x8xf32>
    %27 = arith.addf %25, %26 : vector<4x8xf32>
    %c0_18 = arith.constant 0 : index
    %c0_19 = arith.constant 0 : index
    %28 = vector.load %arg8[%c0_18, %c0_19] : memref<4x8xf32, #tpu.memory_space<vmem>>, vector<4x8xf32>
    tpu.vector_store %arg8[%c0_18, %c0_19], %27 {strides = array<i32>} : memref<4x8xf32, #tpu.memory_space<vmem>>, vector<4x8xf32>,
    %c1_i32 = arith.constant 1 : i32
    %29 = arith.cmpi eq, %arg2, %c1_i32 : i32
    %30 = arith.extui %29 : i1 to i32
    %c0_i32_20 = arith.constant 0 : i32
    %31 = arith.cmpi ne, %30, %c0_i32_20 : i32
    scf.if %31 {
      %c0_21 = arith.constant 0 : index
      %c0_22 = arith.constant 0 : index
      %32 = vector.load %arg7[%c0_21, %c0_22] : memref<4x1xf32, #tpu.memory_space<vmem>>, vector<4x1xf32>
      %33 = tpu.reciprocal %32 : vector<4x1xf32> -> vector<4x1xf32>
      %c0_23 = arith.constant 0 : index
      %c0_24 = arith.constant 0 : index
      %34 = vector.load %arg8[%c0_23, %c0_24] : memref<4x8xf32, #tpu.memory_space<vmem>>, vector<4x8xf32>
      %35 = vector.broadcast %33 : vector<4x1xf32> to vector<4x8xf32>
      %36 = arith.mulf %34, %35 : vector<4x8xf32>
      %c0_25 = arith.constant 0 : index
      %c0_26 = arith.constant 0 : index
      %c0_27 = arith.constant 0 : index
      %37 = vector.load %arg5[%c0_25, %c0_26, %c0_27] : memref<1x4x8xf32, #tpu.memory_space<vmem>>, vector<1x4x8xf32>
      %38 = vector.shape_cast %37 : vector<1x4x8xf32> to vector<4x8xf32>
      %39 = vector.shape_cast %36 : vector<4x8xf32> to vector<1x4x8xf32>
      tpu.vector_store %arg5[%c0_25, %c0_26, %c0_27], %39 {strides = array<i32>} : memref<1x4x8xf32, #tpu.memory_space<vmem>>, vector<1x4x8xf32>,
    } else {
    }
    return
  }
  func.func @transform_0(%arg0: i32, %arg1: i32, %arg2: i32) -> (i32, i32, i32) {
    %c0_i32 = arith.constant 0 : i32
    %c0_i32_0 = arith.constant 0 : i32
    return %arg0, %c0_i32, %arg2 : i32, i32, i32
  }
  func.func @transform_1(%arg0: i32, %arg1: i32, %arg2: i32) -> (i32, i32, i32) {
    %c0_i32 = arith.constant 0 : i32
    return %arg0, %arg1, %arg2 : i32, i32, i32
  }
  func.func @transform_2(%arg0: i32, %arg1: i32, %arg2: i32) -> (i32, i32, i32) {
    %c0_i32 = arith.constant 0 : i32
    %c0_i32_0 = arith.constant 0 : i32
    return %arg0, %c0_i32, %arg1 : i32, i32, i32
  }
}

</mosaic_0001>

<llo_original>
// kernel: tpu_custom_call.1
$region0: #{tpu_custom_call.1}
  #allocation0 [shape = 'u32[]', space=smem, size = 0x4, offset = 0x4, fixed_abs, tag = 'smem constant byte address 0x4 - core index']
  #allocation1 [shape = 'u32[144,128]{1,0:T(1,128)}', space=vmem, size = 0x12000, scoped, tag = 'internal scratch']
  #allocation2 [shape = 'f32[4,1]{1,0:T(4,128)}', space=vmem, size = 0x800, scoped, tag = 'scratch operand']
  #allocation3 [shape = 'f32[4,1]{1,0:T(4,128)}', space=vmem, size = 0x800, scoped, tag = 'scratch operand']
  #allocation4 [shape = 'f32[4,8]{1,0:T(4,128)}', space=vmem, size = 0x800, scoped, tag = 'scratch operand']
  %s0 = inlined_call_operand.hbm [shape: f32[2,4,256], index: 0, kind: input, shape index: {}]
  %s1 = inlined_call_operand.hbm [shape: f32[2,8,256], index: 1, kind: input, shape index: {}]
  %s2 = inlined_call_operand.hbm [shape: f32[2,4,8], index: 2, kind: output, shape index: {}]
  %s3 = sld [smem:[#allocation0]]
  $region57: #{tpu_custom_call.1} parent=0
    _
  %s5 = ssub.s32 1, %s3
  %s6 = scalar_select 0, %s5, %s3
  $region1: #{tpu_custom_call.1} parent=0
    #allocation5 [shape = 'u8[4096]{0}', space=vmem, size = 0x1000, scoped, tag = 'input window, operand 0']
    #allocation6 [shape = 's32[2]{0}', space=sflag, size = 0x8, scoped, tag = 'scoped memory for tpu_custom_call.1']
    #allocation7 [shape = 's32[2]{0}', space=sflag, size = 0x8, scoped, tag = 'scoped memory for tpu_custom_call.1']
    #allocation8 [shape = 'u8[8192]{0}', space=vmem, size = 0x2000, scoped, tag = 'input window, operand 1']
    #allocation9 [shape = 's32[2]{0}', space=sflag, size = 0x8, scoped, tag = 'scoped memory for tpu_custom_call.1']
    #allocation10 [shape = 'u8[4096]{0}', space=vmem, size = 0x1000, scoped, tag = 'output window, operand 0']
    %7 = vsyncpa [#allocation6], 0
    %s8 = scalar_lea.sflag [#allocation6], 1
    %9 = vsyncpa %s8, 0
    %10 = vsyncpa [#allocation9], 0
    %s11 = scalar_lea.sflag [#allocation9], 1
    %12 = vsyncpa %s11, 0
    %13 = vsyncpa [#allocation7], 0
    %s14 = scalar_lea.sflag [#allocation7], 1
    %15 = vsyncpa %s14, 0
    loop: start=0, step=1, limit=6
    $region2: #{tpu_custom_call.1} parent=1 // loop_pre_header
      _
    $region3: #{tpu_custom_call.1} parent=1 // loop_header
      %s17 = sphi 0, %s21
      %p18 = scmp.ge.s32.totalorder %s17, 6
      %s24 = sphi 0, %s43
      %s25 = sphi 0, %s39
      %s26 = sphi 0, %s35
      %s27 = sphi 0, %s24
      %s28 = sphi 0, %s25
      %s29 = sphi 0, %s26
      %s30 = sphi 0, %s27
      %s31 = sphi 0, %s28
      %s32 = sphi 0, %s29
      %s48 = sphi 0, %s50
      %s51 = sphi 0, %s48
      %s52 = sphi 0, %s51
      %s68 = sphi 0, %s52
      %s78 = sphi 0, %s80
      %s81 = sphi 0, %s78
      %s82 = sphi 0, %s81
      %s98 = sphi 0, %s82
      %s106 = sphi 0, %s108
      %s109 = sphi 0, %s106
      %s110 = sphi 0, %s109
      %s126 = sphi 0, %s110
    $region4: #{tpu_custom_call.1} parent=1 // loop_header_branch
      %20 = sbr.rel (%p18) target = $region8
    $region5: #{tpu_custom_call.1} parent=1 // loop_body
      %s22 = ssub.s32 %s17, 1
      %s23 = ssub.s32 %s17, 2
      %s33 = sadd.s32 1, %s26
      %p34 = scmp.ge.s32.totalorder %s33, 2
      %s35 = scalar_select %p34, 0, %s33
      %s36 = sadd.s32 1, %s25
      %s37 = scalar_select %p34, %s36, %s25
      %p38 = scmp.ge.s32.totalorder %s37, 1
      %s39 = scalar_select %p38, 0, %s37
      %s40 = sadd.s32 1, %s24
      %s41 = scalar_select %p38, %s40, %s24
      %p42 = scmp.ge.s32.totalorder %s41, 2
      %s43 = scalar_select %p42, 0, %s41
      %s44 = ssub.s32 %s24, %s43
      %s45 = ssub.s32 %s26, %s35
      %s46 = sor.u32 %s44, %s45
      %p47 = scmp.eq.s32.totalorder %s46, 0
      %s49 = sadd.s32 %s48, 1
      %s50 = scalar_select %p47, %s48, %s49
      %p53 = pneg %p47
      %p54 = scmp.eq.s32.totalorder %s17, 3
      %p55 = por %p53, %p54
      %p56 = scmp.ne.s32.totalorder %s48, %s51
      %p57 = scmp.eq.s32.totalorder %s17, 0
      %p58 = por %p56, %p57
      %p59 = scmp.ne.s32.totalorder %s48, %s51
      %p60 = scmp.eq.s32.totalorder %s22, 3
      %p61 = por %p59, %p60
      %p62 = scmp.ne.s32.totalorder %s51, %s52
      %p63 = scmp.eq.s32.totalorder %s22, 0
      %p64 = por %p62, %p63
      %p65 = scmp.ne.s32.totalorder %s51, %s52
      %p66 = scmp.eq.s32.totalorder %s23, 3
      %p67 = por %p65, %p66
      %p69 = scmp.ne.s32.totalorder %s52, %s68
      %p70 = scmp.eq.s32.totalorder %s23, 0
      %p71 = por %p69, %p70
      %s72 = ssub.s32 %s24, %s43
      %s73 = ssub.s32 %s25, %s39
      %s74 = sor.u32 %s72, %s73
      %s75 = ssub.s32 %s26, %s35
      %s76 = sor.u32 %s74, %s75
      %p77 = scmp.eq.s32.totalorder %s76, 0
      %s79 = sadd.s32 %s78, 1
      %s80 = scalar_select %p77, %s78, %s79
      %p83 = pneg %p77
      %p84 = scmp.eq.s32.totalorder %s17, 3
      %p85 = por %p83, %p84
      %p86 = scmp.ne.s32.totalorder %s78, %s81
      %p87 = scmp.eq.s32.totalorder %s17, 0
      %p88 = por %p86, %p87
      %p89 = scmp.ne.s32.totalorder %s78, %s81
      %p90 = scmp.eq.s32.totalorder %s22, 3
      %p91 = por %p89, %p90
      %p92 = scmp.ne.s32.totalorder %s81, %s82
      %p93 = scmp.eq.s32.totalorder %s22, 0
      %p94 = por %p92, %p93
      %p95 = scmp.ne.s32.totalorder %s81, %s82
      %p96 = scmp.eq.s32.totalorder %s23, 3
      %p97 = por %p95, %p96
      %p99 = scmp.ne.s32.totalorder %s82, %s98
      %p100 = scmp.eq.s32.totalorder %s23, 0
      %p101 = por %p99, %p100
      %s102 = ssub.s32 %s24, %s43
      %s103 = ssub.s32 %s25, %s39
      %s104 = sor.u32 %s102, %s103
      %p105 = scmp.eq.s32.totalorder %s104, 0
      %s107 = sadd.s32 %s106, 1
      %s108 = scalar_select %p105, %s106, %s107
      %p111 = pneg %p105
      %p112 = scmp.eq.s32.totalorder %s17, 3
      %p113 = por %p111, %p112
      %p114 = scmp.ne.s32.totalorder %s106, %s109
      %p115 = scmp.eq.s32.totalorder %s17, 0
      %p116 = por %p114, %p115
      %p117 = scmp.ne.s32.totalorder %s106, %s109
      %p118 = scmp.eq.s32.totalorder %s22, 3
      %p119 = por %p117, %p118
      %p120 = scmp.ne.s32.totalorder %s109, %s110
      %p121 = scmp.eq.s32.totalorder %s22, 0
      %p122 = por %p120, %p121
      %p123 = scmp.ne.s32.totalorder %s109, %s110
      %p124 = scmp.eq.s32.totalorder %s23, 3
      %p125 = por %p123, %p124
      %p127 = scmp.ne.s32.totalorder %s110, %s126
      %p128 = scmp.eq.s32.totalorder %s23, 0
      %p129 = por %p127, %p128
      %p130 = scmp.le.s32.totalorder 1, %s17
      %p131 = scmp.lt.s32.totalorder %s17, 5
      %p132 = pnand %p130, %p131
      %p133 = pneg %p132
      // Predicated region
      $region9: #{tpu_custom_call.1} parent=5 // pred_check
        _
      $region10: #{tpu_custom_call.1} parent=5 // pred_check_branch
        %135 = sbr.rel (%p132) target = $region12
      $region11: #{tpu_custom_call.1} parent=5 // pred_region
        %s136 = ssub.s32 %s17, 1
      $region12: #{tpu_custom_call.1} parent=5 // pred_fallthru
        _
      %p137 = scmp.lt.s32.totalorder %s17, 4
      // Predicated region
      $region13: #{tpu_custom_call.1} parent=5 // pred_check
        %p138 = pneg %p137
      $region14: #{tpu_custom_call.1} parent=5 // pred_check_branch
        %140 = sbr.rel (%p138) target = $region16
      $region15: #{tpu_custom_call.1} parent=5 // pred_region
        // Predicated region
        $region17: #{tpu_custom_call.1} parent=15 // pred_check
          %p141 = pneg %p58
        $region18: #{tpu_custom_call.1} parent=15 // pred_check_branch
          %143 = sbr.rel (%p141) target = $region20
        $region19: #{tpu_custom_call.1} parent=15 // pred_region
          %s144 = sand.u32 %s48, 1
          %s145 = scalar_lea.sflag [#allocation6], %s144
          %s146 = sand.u32 %s48, 1
          %s147 = smul.addr %s146, 4
          %s148 = scalar_lea.vmem [#allocation5], %s147
          %s150 = ssub.s32 64, 64
          %151 = vsyncadd %s145, %s150
          %s152 = smul.addr %s24, 2
          %s153 = sadd.s32 %s26, %s152
          %s154 = smul.addr %s153, 64
          %s155 = scalar_lea.hbm %s0, %s154
          %s157 = sshll.u32 %s148, 4
          %s158 = int_to_ptr.vmem [resolvable:$true] %s157
          %160 = dma.hbm_to_vmem [thread:$0]  %s155, 64, %s158, %s145
        $region20: #{tpu_custom_call.1} parent=15 // pred_fallthru
          _
        // Predicated region
        $region21: #{tpu_custom_call.1} parent=15 // pred_check
          %p161 = pneg %p88
        $region22: #{tpu_custom_call.1} parent=15 // pred_check_branch
          %163 = sbr.rel (%p161) target = $region24
        $region23: #{tpu_custom_call.1} parent=15 // pred_region
          %s164 = sand.u32 %s78, 1
          %s165 = scalar_lea.sflag [#allocation9], %s164
          %s166 = sand.u32 %s78, 1
          %s167 = smul.addr %s166, 8
          %s168 = scalar_lea.vmem [#allocation8], %s167
          %s170 = ssub.s32 128, 128
          %171 = vsyncadd %s165, %s170
          %s172 = smul.addr %s25, 2
          %s173 = sadd.s32 %s26, %s172
          %s174 = smul.addr %s24, 2
          %s175 = sadd.s32 %s173, %s174
          %s176 = smul.addr %s175, 128
          %s177 = scalar_lea.hbm %s1, %s176
          %s179 = sshll.u32 %s168, 4
          %s180 = int_to_ptr.vmem [resolvable:$true] %s179
          %182 = dma.hbm_to_vmem [thread:$0]  %s177, 128, %s180, %s165
        $region24: #{tpu_custom_call.1} parent=15 // pred_fallthru
          _
      $region16: #{tpu_custom_call.1} parent=5 // pred_fallthru
        _
      %p183 = scmp.le.s32.totalorder 1, %s17
      %p184 = scmp.lt.s32.totalorder %s17, 5
      %p185 = pnand %p183, %p184
      %p186 = pneg %p185
      // Predicated region
      $region25: #{tpu_custom_call.1} parent=5 // pred_check
        _
      $region26: #{tpu_custom_call.1} parent=5 // pred_check_branch
        %188 = sbr.rel (%p185) target = $region28
      $region27: #{tpu_custom_call.1} parent=5 // pred_region
        %s189 = ssub.s32 %s17, 1
        %s190 = sand.u32 %s51, 1
        %s191 = scalar_lea.sflag [#allocation6], %s190
        %s192 = sand.u32 %s51, 1
        %s193 = smul.addr %s192, 4
        %s194 = scalar_lea.vmem [#allocation5], %s193
        // Predicated region
        $region29: #{tpu_custom_call.1} parent=27 // pred_check
          %p195 = pneg %p64
        $region30: #{tpu_custom_call.1} parent=27 // pred_check_branch
          %197 = sbr.rel (%p195) target = $region32
        $region31: #{tpu_custom_call.1} parent=27 // pred_region
          %198 = dma.done %s191, 64
        $region32: #{tpu_custom_call.1} parent=27 // pred_fallthru
          _
        %s199 = sand.u32 %s81, 1
        %s200 = scalar_lea.sflag [#allocation9], %s199
        %s201 = sand.u32 %s81, 1
        %s202 = smul.addr %s201, 8
        %s203 = scalar_lea.vmem [#allocation8], %s202
        // Predicated region
        $region33: #{tpu_custom_call.1} parent=27 // pred_check
          %p204 = pneg %p94
        $region34: #{tpu_custom_call.1} parent=27 // pred_check_branch
          %206 = sbr.rel (%p204) target = $region36
        $region35: #{tpu_custom_call.1} parent=27 // pred_region
          %207 = dma.done %s200, 128
        $region36: #{tpu_custom_call.1} parent=27 // pred_fallthru
          _
        %s208 = sand.u32 %s51, 1
        %s209 = scalar_lea.sflag [#allocation6], %s208
        %s210 = sand.u32 %s51, 1
        %s211 = smul.addr %s210, 4
        %s212 = scalar_lea.vmem [#allocation5], %s211
        %p213 = pneg %p64
        %p214 = pneg %p61
        %s215 = sand.u32 %s81, 1
        %s216 = scalar_lea.sflag [#allocation9], %s215
        %s217 = sand.u32 %s81, 1
        %s218 = smul.addr %s217, 8
        %s219 = scalar_lea.vmem [#allocation8], %s218
        %p220 = pneg %p94
        %p221 = pneg %p91
        %p222 = pneg %p122
        %p223 = pneg %p119
        %s224 = sand.u32 %s109, 1
        %s225 = scalar_lea.sflag [#allocation7], %s224
        %s226 = sand.u32 %s109, 1
        %s227 = smul.addr %s226, 4
        %s228 = scalar_lea.vmem [#allocation10], %s227
        %p229 = scmp.eq.s32.totalorder %s29, 0
        // Predicated region
        $region37: #{tpu_custom_call.1} parent=27 // pred_check
          %p230 = pneg %p229
        $region38: #{tpu_custom_call.1} parent=27 // pred_check_branch
          %232 = sbr.rel (%p230) target = $region40
        $region39: #{tpu_custom_call.1} parent=27 // pred_region
          %vm233 = vcmask 3072
          %234 = vst.msk [vmem:[#allocation2] sm:$0xf] %vm233, -inf
          %235 = vst.msk [vmem:[#allocation3] sm:$0xf] %vm233, 0.0
          %vm236 = vcmask 60416
          %237 = vst.msk [vmem:[#allocation4] sm:$0xf] %vm236, 0.0
        $region40: #{tpu_custom_call.1} parent=27 // pred_fallthru
          _
        %v238 = vld [vmem:[%s194] sm:$0xf]
        %v239 = vld [vmem:[%s203] sm:$0xff]
        %v240 = vld [vmem:[#allocation2] sm:$0xf]
        %vm241 = vcmask 1043456
        %v242 = vsel %vm241, %v238, -inf
        %243 = vmax.xlane.f32.xlu0 %v242
        %v244 = vpop.xlane.xlu0 %243
        %v245 = vmax.f32 %v240, %v244
        %v246 = vsub.f32 %v240, %v245
        %v247 = vmul.f32 %v246, 1.442695
        %v248 = vpow.pop %v247
        %250 = vset.pattern.permute.xlu0 0
        %251 = vperm.xlu0 %250, %v245
        %v252 = vpop.permute.xlu0 %251
        %v254 = vsub.f32 %v238, %v252
        %v255 = vmul.f32 %v254, 1.442695
        %v256 = vpow.pop %v255
        %v257 = vld [vmem:[#allocation3] sm:$0xf]
        %v258 = vmul.f32 %v248, %v257
        %v259 = vsel %vm241, %v256, 0.0
        %260 = vadd.xlane.f32.xlu0 %v259
        %v261 = vpop.xlane.xlu0 %260
        %v262 = vadd.f32 %v258, %v261
        %vm263 = vcmask 3072
        %264 = vst.msk [vmem:[#allocation3] sm:$0xf] %vm263, %v262
        %265 = vst.msk [vmem:[#allocation2] sm:$0xf] %vm263, %v245
        %v266 = vld [vmem:[#allocation4] sm:$0xf]
        %268 = vset.pattern.permute.xlu0 0
        %269 = vperm.xlu0 %268, %v248
        %v270 = vpop.permute.xlu0 %269
        %v272 = vmul.f32 %v270, %v266
        %273 = vmatprep.subr.mxu0 0.0
        %274 = vmatpush1.xpose.msra.mxu0 0.0
        %275 = vmatprep.subr.mxu0 0.0
        %276 = vmatpush1.xpose.msra.mxu0 0.0
        %277 = vmatprep.subr.mxu0 0.0
        %278 = vmatpush1.xpose.msra.mxu0 0.0
        %279 = vmatprep.subr.mxu0 0.0
        %280 = vmatpush1.xpose.msra.mxu0 0.0
        %281 = vmatprep.subr.mxu0 0.0
        %282 = vmatpush1.xpose.msra.mxu0 0.0
        %283 = vmatprep.subr.mxu0 0.0
        %284 = vmatpush1.xpose.msra.mxu0 0.0
        %285 = vmatprep.subr.mxu0 0.0
        %286 = vmatpush1.xpose.msra.mxu0 0.0
        %287 = vmatprep.subr.mxu0 0.0
        %288 = vmatpush1.xpose.msra.mxu0 0.0
        %289 = vmatprep.subr.mxu0 0.0
        %290 = vmatpush1.xpose.msra.mxu0 0.0
        %291 = vmatprep.subr.mxu0 0.0
        %292 = vmatpush1.xpose.msra.mxu0 0.0
        %293 = vmatprep.subr.mxu0 0.0
        %294 = vmatpush1.xpose.msra.mxu0 0.0
        %295 = vmatprep.subr.mxu0 0.0
        %296 = vmatpush1.xpose.msra.mxu0 0.0
        %297 = vmatprep.subr.mxu0 0.0
        %298 = vmatpush1.xpose.msra.mxu0 0.0
        %299 = vmatprep.subr.mxu0 0.0
        %300 = vmatpush1.xpose.msra.mxu0 0.0
        %301 = vmatprep.subr.mxu0 0.0
        %302 = vmatpush1.xpose.msra.mxu0 0.0
        %303 = vmatprep.subr.mxu0 0.0
        %304 = vmatpush1.xpose.msra.mxu0 %v239
        %305 = vmatprep.subr.mxu0 0.0
        %306 = vmatpush2.xpose.msra.mxu0 0.0
        %307 = vmatprep.subr.mxu0 0.0
        %308 = vmatpush2.xpose.msra.mxu0 0.0
        %309 = vmatprep.subr.mxu0 0.0
        %310 = vmatpush2.xpose.msra.mxu0 0.0
        %311 = vmatprep.subr.mxu0 0.0
        %312 = vmatpush2.xpose.msra.mxu0 0.0
        %313 = vmatprep.subr.mxu0 0.0
        %314 = vmatpush2.xpose.msra.mxu0 0.0
        %315 = vmatprep.subr.mxu0 0.0
        %316 = vmatpush2.xpose.msra.mxu0 0.0
        %317 = vmatprep.subr.mxu0 0.0
        %318 = vmatpush2.xpose.msra.mxu0 0.0
        %319 = vmatprep.subr.mxu0 0.0
        %320 = vmatpush2.xpose.msra.mxu0 0.0
        %321 = vmatprep.subr.mxu0 0.0
        %322 = vmatpush2.xpose.msra.mxu0 0.0
        %323 = vmatprep.subr.mxu0 0.0
        %324 = vmatpush2.xpose.msra.mxu0 0.0
        %325 = vmatprep.subr.mxu0 0.0
        %326 = vmatpush2.xpose.msra.mxu0 0.0
        %327 = vmatprep.subr.mxu0 0.0
        %328 = vmatpush2.xpose.msra.mxu0 0.0
        %329 = vmatprep.subr.mxu0 0.0
        %330 = vmatpush2.xpose.msra.mxu0 0.0
        %331 = vmatprep.subr.mxu0 0.0
        %332 = vmatpush2.xpose.msra.mxu0 0.0
        %333 = vmatprep.subr.mxu0 0.0
        %334 = vmatpush2.xpose.msra.mxu0 0.0
        %335 = vmatprep.subr.mxu0 0.0
        %336 = vmatpush2.xpose.msra.mxu0 0.0
        %337 = vmatprep.mubr.f32.mxu0 0.0
        %338 = vmatmul.mubr.f32.gmra.mxu0 %v256
        %v339 = vpop.f32.mrf.mxu0
        %v340 = vadd.f32 0.0, %v339
        %v341 = vpop.f32.mrf.mxu0
        %342 = vdwg.mxu0
        %v343 = vadd.f32 %v272, %v340
        %vm344 = vcmask 60416
        %345 = vst.msk [vmem:[#allocation4] sm:$0xf] %vm344, %v343
        %p346 = scmp.eq.s32.totalorder %s29, 1
        // Predicated region
        $region41: #{tpu_custom_call.1} parent=27 // pred_check
          %p347 = pneg %p346
        $region42: #{tpu_custom_call.1} parent=27 // pred_check_branch
          %349 = sbr.rel (%p347) target = $region44
        $region43: #{tpu_custom_call.1} parent=27 // pred_region
          %v350 = vld [vmem:[#allocation3] sm:$0xf]
          %v351 = vrcp.pop %v350
          %v352 = vld [vmem:[#allocation4] sm:$0xf]
          %354 = vset.pattern.permute.xlu0 0
          %355 = vperm.xlu0 %354, %v351
          %v356 = vpop.permute.xlu0 %355
          %v358 = vmul.f32 %v352, %v356
          %359 = vst.msk [vmem:[%s228] sm:$0xf] %vm344, %v358
        $region44: #{tpu_custom_call.1} parent=27 // pred_fallthru
          _
        %s360 = sand.u32 %s109, 1
        %s361 = scalar_lea.sflag [#allocation7], %s360
        %s362 = sand.u32 %s109, 1
        %s363 = smul.addr %s362, 4
        %s364 = scalar_lea.vmem [#allocation10], %s363
        // Predicated region
        $region45: #{tpu_custom_call.1} parent=27 // pred_check
          %p365 = pneg %p119
        $region46: #{tpu_custom_call.1} parent=27 // pred_check_branch
          %367 = sbr.rel (%p365) target = $region48
        $region47: #{tpu_custom_call.1} parent=27 // pred_region
          %s369 = ssub.s32 64, 64
          %370 = vsyncadd %s361, %s369
          %s371 = sadd.s32 %s28, %s27
          %s372 = smul.addr %s371, 64
          %s373 = scalar_lea.hbm %s2, %s372
          %s375 = sshll.u32 %s364, 4
          %s376 = int_to_ptr.vmem [resolvable:$true] %s375
          %378 = dma.vmem_to_hbm [thread:$0]  %s376, 64, %s373, %s361
        $region48: #{tpu_custom_call.1} parent=27 // pred_fallthru
          _
      $region28: #{tpu_custom_call.1} parent=5 // pred_fallthru
        _
      %p379 = scmp.le.s32.totalorder 2, %s17
      // Predicated region
      $region49: #{tpu_custom_call.1} parent=5 // pred_check
        %p380 = pneg %p379
      $region50: #{tpu_custom_call.1} parent=5 // pred_check_branch
        %382 = sbr.rel (%p380) target = $region52
      $region51: #{tpu_custom_call.1} parent=5 // pred_region
        %s383 = ssub.s32 %s17, 2
        // Predicated region
        $region53: #{tpu_custom_call.1} parent=51 // pred_check
          %p384 = pneg %p125
        $region54: #{tpu_custom_call.1} parent=51 // pred_check_branch
          %386 = sbr.rel (%p384) target = $region56
        $region55: #{tpu_custom_call.1} parent=51 // pred_region
          %s387 = sand.u32 %s110, 1
          %s388 = scalar_lea.sflag [#allocation7], %s387
          %s389 = sand.u32 %s110, 1
          %s390 = smul.addr %s389, 4
          %s391 = scalar_lea.vmem [#allocation10], %s390
          %392 = dma.done %s388, 64
        $region56: #{tpu_custom_call.1} parent=51 // pred_fallthru
          _
      $region52: #{tpu_custom_call.1} parent=5 // pred_fallthru
        _
    $region6: #{tpu_custom_call.1} parent=1 // loop_footer
      %s21 = sadd.s32 1, %s17
    $region7: #{tpu_custom_call.1} parent=1 // loop_footer_branch
      %16 = sbr.rel target = $region3
    $region8: #{tpu_custom_call.1} parent=1 // loop_exit
      _
    %393 = vsyncpa [#allocation6], 1
    %s394 = scalar_lea.sflag [#allocation6], 1
    %395 = vsyncpa %s394, 1
    %396 = vsyncpa [#allocation9], 1
    %s397 = scalar_lea.sflag [#allocation9], 1
    %398 = vsyncpa %s397, 1
    %399 = vsyncpa [#allocation7], 1
    %s400 = scalar_lea.sflag [#allocation7], 1
    %401 = vsyncpa %s400, 1

</llo_original>
